<compile_context>
chip_gen: v5e
topology: v5e:2x2
jax: 0.10.0
libtpu: 0.0.40
codegen_flags: <defaults>
</compile_context>

<pallas_src>
import functools

import jax
import jax.numpy as jnp
from jax.experimental import pallas as pl
from jax.experimental.pallas import tpu as pltpu


def _round_up(n, mult):
    return ((n + mult - 1) // mult) * mult


def _aam_kernel(x_ref, w_ref, inv_x_ref, inv_w_ref, lab_ref, o_ref, *, m, s):
    # Raw dot product on the MXU: (TILE_B, D) x (TILE_C, D)^T -> (TILE_B, TILE_C), f32 acc.
    dot = jax.lax.dot_general(
        x_ref[...], w_ref[...],
        dimension_numbers=(((1,), (1,)), ((), ())),
        preferred_element_type=jnp.float32,
    )

    # Fold the L2 normalization in as a cheap output-tile scaling (O(B*C), not O(C*D)).
    cosine = dot * inv_x_ref[...] * inv_w_ref[...]   # (TB,1) and (1,TC) broadcasts

    tb, tc = cosine.shape
    # Global class index of each output column (offset by the class-tile origin).
    class_ids = (jax.lax.broadcasted_iota(jnp.int32, (tb, tc), 1)
                 + pl.program_id(1) * tc)
    is_target = class_ids == lab_ref[...]            # lab (TB,1) broadcasts to (TB,TC)

    # one_hot*(cos - m) + (1-one_hot)*cos, scaled by s.
    out = jnp.float32(s) * jnp.where(is_target, cosine - jnp.float32(m), cosine)
    o_ref[...] = out.astype(o_ref.dtype)


def aam_softmax(x, weight, label, m=0.2, s=30.0, *,
                tile_b=256, tile_c=1024, stream_dtype=None):
    """AAMsoftmax forward.

    x:      (B, 192) float32 embeddings
    weight: (n_class, 192) float32 class weights
    label:  (B,) int class indices
    returns (B, n_class) float32 logits

    tile_c should be a multiple of 128 (lane-dense output stores); keep
    tile_c <= 1024 on v7x (64 MiB VMEM), larger is fine on v5e/v6e.
    stream_dtype=jnp.bfloat16 halves HBM weight traffic (f32 accumulation kept).
    """
    B, D = x.shape
    C, D2 = weight.shape
    assert D == D2, "feature dims must match"

    x = x.astype(jnp.float32)
    weight = weight.astype(jnp.float32)

    tile_b = min(tile_b, _round_up(B, 8))
    tile_c = min(tile_c, _round_up(C, 128))
    Bp = _round_up(B, tile_b)
    Cp = _round_up(C, tile_c)

    if Bp != B:
        x = jnp.pad(x, ((0, Bp - B), (0, 0)))
    if Cp != C:
        weight = jnp.pad(weight, ((0, Cp - C), (0, 0)))
    lab = jnp.pad(jnp.asarray(label, dtype=jnp.int32).reshape(-1),
                  (0, Bp - B)).reshape(Bp, 1)

    # Inverse L2 norms, computed once in f32 (tiny O(B*D)/O(C*D) XLA reductions).
    # rsqrt(max(sumsq, eps^2)) == 1 / max(norm, eps) with eps = 1e-12 (F.normalize).
    eps2 = jnp.float32(1e-24)
    inv_x = jax.lax.rsqrt(jnp.maximum(jnp.sum(x * x, axis=1, keepdims=True), eps2))
    inv_w = jax.lax.rsqrt(
        jnp.maximum(jnp.sum(weight * weight, axis=1, keepdims=True), eps2)
    ).reshape(1, Cp)

    if stream_dtype is not None:
        x_mm = x.astype(stream_dtype)
        w_mm = weight.astype(stream_dtype)
    else:
        x_mm, w_mm = x, weight

    grid = (Bp // tile_b, Cp // tile_c)
    kernel = functools.partial(_aam_kernel, m=float(m), s=float(s))

    out = pl.pallas_call(
        kernel,
        out_shape=jax.ShapeDtypeStruct((Bp, Cp), jnp.float32),
        grid=grid,
        in_specs=[
            pl.BlockSpec((tile_b, D), lambda i, j: (i, 0)),   # x tile
            pl.BlockSpec((tile_c, D), lambda i, j: (j, 0)),   # weight tile (streamed)
            pl.BlockSpec((tile_b, 1), lambda i, j: (i, 0)),   # inv ||x||
            pl.BlockSpec((1, tile_c), lambda i, j: (0, j)),   # inv ||w||
            pl.BlockSpec((tile_b, 1), lambda i, j: (i, 0)),   # labels
        ],
        out_specs=pl.BlockSpec((tile_b, tile_c), lambda i, j: (i, j)),
        compiler_params=pltpu.CompilerParams(
            dimension_semantics=("parallel", "parallel")),
    )(x_mm, w_mm, inv_x, inv_w, lab)

    return out[:B, :C]


def _reference(x, weight, label, m=0.2, s=30.0):
    eps = 1e-12
    x_n = x / jnp.maximum(jnp.linalg.norm(x, axis=1, keepdims=True), eps)
    w_n = weight / jnp.maximum(jnp.linalg.norm(weight, axis=1, keepdims=True), eps)
    cosine = x_n @ w_n.T
    one_hot = jax.nn.one_hot(label, weight.shape[0], dtype=cosine.dtype)
    return s * (one_hot * (cosine - m) + (1.0 - one_hot) * cosine)


if __name__ == "__main__":
    key = jax.random.PRNGKey(0)
    D = 192          # embedding dim fixed by the module
    B = 16           # small batch
    n_class = 384    # small synthetic class count (3 class tiles of 128)

    kx, kw, kl = jax.random.split(key, 3)
    x = jax.random.normal(kx, (B, D), dtype=jnp.float32)

    # xavier_uniform_ for weight of shape (n_class, 192)
    limit = (6.0 / (n_class + D)) ** 0.5
    weight = jax.random.uniform(kw, (n_class, D), dtype=jnp.float32,
                                minval=-limit, maxval=limit)
    label = jax.random.randint(kl, (B,), 0, n_class, dtype=jnp.int32)

    ref = _reference(x, weight, label, m=0.2, s=30.0)

    # f32 path, multi-tile grid (2 batch tiles x 3 class tiles).
    out = jax.block_until_ready(
        aam_softmax(x, weight, label, m=0.2, s=30.0, tile_b=8, tile_c=128))
    assert out.shape == (B, n_class)
    assert jnp.allclose(out, ref, atol=1e-4, rtol=1e-4), "f32 mismatch vs reference"

    # ragged shapes exercising the padding path.
    B2, C2 = 10, 300
    x2 = jax.random.normal(kx, (B2, D), dtype=jnp.float32)
    w2 = jax.random.uniform(kw, (C2, D), dtype=jnp.float32, minval=-limit, maxval=limit)
    l2 = jax.random.randint(kl, (B2,), 0, C2, dtype=jnp.int32)
    out2 = jax.block_until_ready(
        aam_softmax(x2, w2, l2, m=0.2, s=30.0, tile_b=8, tile_c=128))
    ref2 = _reference(x2, w2, l2, m=0.2, s=30.0)
    assert out2.shape == (B2, C2)
    assert jnp.allclose(out2, ref2, atol=1e-4, rtol=1e-4), "padded mismatch vs reference"

    # bf16-streamed matmul operands (halves HBM weight traffic); looser tolerance.
    out_bf16 = jax.block_until_ready(
        aam_softmax(x, weight, label, m=0.2, s=30.0,
                    tile_b=8, tile_c=128, stream_dtype=jnp.bfloat16))
    assert jnp.allclose(out_bf16, ref, atol=0.35), "bf16 mismatch vs reference"

    print("KERNEL_OK")
</pallas_src>

<mosaic_0001>
module attributes {stable_mosaic.version = 11 : i64} {
  func.func @_aam_kernel(%arg0: i32, %arg1: i32, %arg2: memref<8x192xf32, #tpu.memory_space<vmem>>, %arg3: memref<128x192xf32, #tpu.memory_space<vmem>>, %arg4: memref<8x1xf32, #tpu.memory_space<vmem>>, %arg5: memref<1x128xf32, #tpu.memory_space<vmem>>, %arg6: memref<8x1xi32, #tpu.memory_space<vmem>>, %arg7: memref<8x128xf32, #tpu.memory_space<vmem>>) attributes {dimension_semantics = [#tpu.dimension_semantics<parallel>, #tpu.dimension_semantics<parallel>], iteration_bounds = array<i64: 2, 3>, scalar_prefetch = 0 : i64, scratch_operands = 0 : i64, tpu.core_type = #tpu.core_type<tc>, window_params = [{transform_indices = @transform_0, window_bounds = array<i64: 8, 192>}, {transform_indices = @transform_1, window_bounds = array<i64: 128, 192>}, {transform_indices = @transform_2, window_bounds = array<i64: 8, 1>}, {transform_indices = @transform_3, window_bounds = array<i64: 1, 128>}, {transform_indices = @transform_4, window_bounds = array<i64: 8, 1>}, {transform_indices = @transform_5, window_bounds = array<i64: 8, 128>}]} {
    %c0 = arith.constant 0 : index
    %c0_0 = arith.constant 0 : index
    %0 = vector.load %arg2[%c0, %c0_0] : memref<8x192xf32, #tpu.memory_space<vmem>>, vector<8x192xf32>
    %c0_1 = arith.constant 0 : index
    %c0_2 = arith.constant 0 : index
    %1 = vector.load %arg3[%c0_1, %c0_2] : memref<128x192xf32, #tpu.memory_space<vmem>>, vector<128x192xf32>
    %cst = arith.constant dense<0.000000e+00> : vector<8x128xf32>
    %2 = tpu.matmul %0, %1, %cst {dimension_numbers = #tpu.dot_dimension_numbers<[1], [1], [0], [0], [0, 0, 1, 0], [], []>} : vector<8x192xf32>, vector<128x192xf32>, vector<8x128xf32> -> vector<8x128xf32>
    %c0_3 = arith.constant 0 : index
    %c0_4 = arith.constant 0 : index
    %3 = vector.load %arg4[%c0_3, %c0_4] : memref<8x1xf32, #tpu.memory_space<vmem>>, vector<8x1xf32>
    %4 = vector.broadcast %3 : vector<8x1xf32> to vector<8x128xf32>
    %5 = arith.mulf %2, %4 : vector<8x128xf32>
    %c0_5 = arith.constant 0 : index
    %c0_6 = arith.constant 0 : index
    %6 = vector.load %arg5[%c0_5, %c0_6] : memref<1x128xf32, #tpu.memory_space<vmem>>, vector<1x128xf32>
    %7 = vector.broadcast %6 : vector<1x128xf32> to vector<8x128xf32>
    %8 = arith.mulf %5, %7 : vector<8x128xf32>
    %9 = tpu.iota {dimensions = array<i32: 1>} : vector<8x128xi32>
    %c128_i32 = arith.constant 128 : i32
    %10 = arith.muli %arg1, %c128_i32 : i32
    %11 = vector.broadcast %10 : i32 to vector<8x128xi32>
    %12 = arith.addi %9, %11 : vector<8x128xi32>
    %c0_7 = arith.constant 0 : index
    %c0_8 = arith.constant 0 : index
    %13 = vector.load %arg6[%c0_7, %c0_8] : memref<8x1xi32, #tpu.memory_space<vmem>>, vector<8x1xi32>
    %14 = vector.broadcast %13 : vector<8x1xi32> to vector<8x128xi32>
    %15 = arith.cmpi eq, %12, %14 : vector<8x128xi32>
    %cst_9 = arith.constant 2.000000e-01 : f32
    %16 = vector.broadcast %cst_9 : f32 to vector<8x128xf32>
    %17 = arith.subf %8, %16 : vector<8x128xf32>
    %18 = arith.select %15, %17, %8 : vector<8x128xi1>, vector<8x128xf32>
    %cst_10 = arith.constant 3.000000e+01 : f32
    %19 = vector.broadcast %cst_10 : f32 to vector<8x128xf32>
    %20 = arith.mulf %19, %18 : vector<8x128xf32>
    %c0_11 = arith.constant 0 : index
    %c0_12 = arith.constant 0 : index
    %21 = vector.load %arg7[%c0_11, %c0_12] : memref<8x128xf32, #tpu.memory_space<vmem>>, vector<8x128xf32>
    tpu.vector_store %arg7[%c0_11, %c0_12], %20 {strides = array<i32>} : memref<8x128xf32, #tpu.memory_space<vmem>>, vector<8x128xf32>,
    return
  }
  func.func @transform_0(%arg0: i32, %arg1: i32) -> (i32, i32) {
    %c0_i32 = arith.constant 0 : i32
    %c0_i32_0 = arith.constant 0 : i32
    return %arg0, %c0_i32 : i32, i32
  }
  func.func @transform_1(%arg0: i32, %arg1: i32) -> (i32, i32) {
    %c0_i32 = arith.constant 0 : i32
    %c0_i32_0 = arith.constant 0 : i32
    return %arg1, %c0_i32 : i32, i32
  }
  func.func @transform_2(%arg0: i32, %arg1: i32) -> (i32, i32) {
    %c0_i32 = arith.constant 0 : i32
    %c0_i32_0 = arith.constant 0 : i32
    return %arg0, %c0_i32 : i32, i32
  }
  func.func @transform_3(%arg0: i32, %arg1: i32) -> (i32, i32) {
    %c0_i32 = arith.constant 0 : i32
    %c0_i32_0 = arith.constant 0 : i32
    return %c0_i32, %arg1 : i32, i32
  }
  func.func @transform_4(%arg0: i32, %arg1: i32) -> (i32, i32) {
    %c0_i32 = arith.constant 0 : i32
    %c0_i32_0 = arith.constant 0 : i32
    return %arg0, %c0_i32 : i32, i32
  }
  func.func @transform_5(%arg0: i32, %arg1: i32) -> (i32, i32) {
    %c0_i32 = arith.constant 0 : i32
    return %arg0, %arg1 : i32, i32
  }
}

</mosaic_0001>

<llo_original>
// kernel: tpu_custom_call.1
$region0: #{tpu_custom_call.1}
  #allocation0 [shape = 'u32[]', space=smem, size = 0x4, offset = 0x4, fixed_abs, tag = 'smem constant byte address 0x4 - core index']
  #allocation1 [shape = 'u32[72,128]{1,0:T(1,128)}', space=vmem, size = 0x9000, scoped, tag = 'internal scratch']
  %s0 = inlined_call_operand.vmem [shape: f32[16,192], index: 0, kind: input, shape index: {}]
  %s1 = inlined_call_operand.vmem [shape: f32[384,192], index: 1, kind: input, shape index: {}]
  %s2 = inlined_call_operand.vmem [shape: f32[16,1], index: 2, kind: input, shape index: {}]
  %s3 = inlined_call_operand.vmem [shape: f32[1,384], index: 3, kind: input, shape index: {}]
  %s4 = inlined_call_operand.vmem [shape: s32[16,1], index: 4, kind: input, shape index: {}]
  %s5 = inlined_call_operand.hbm [shape: f32[16,384], index: 5, kind: output, shape index: {}]
  %s6 = sld [smem:[#allocation0]]
  $region53: #{tpu_custom_call.1} parent=0
    _
  %s8 = ssub.s32 1, %s6
  %s9 = scalar_select 0, %s8, %s6
  $region1: #{tpu_custom_call.1} parent=0
    #allocation2 [shape = 'u8[8192]{0}', space=vmem, size = 0x2000, scoped, tag = 'output window, operand 0']
    #allocation3 [shape = 's32[2]{0}', space=sflag, size = 0x8, scoped, tag = 'scoped memory for tpu_custom_call.1']
    %10 = vsyncpa [#allocation3], 0
    %s11 = scalar_lea.sflag [#allocation3], 1
    %12 = vsyncpa %s11, 0
    loop: start=0, step=1, limit=8
    $region2: #{tpu_custom_call.1} parent=1 // loop_pre_header
      _
    $region3: #{tpu_custom_call.1} parent=1 // loop_header
      %s14 = sphi 0, %s18
      %p15 = scmp.ge.s32.totalorder %s14, 8
      %s21 = sphi 0, %s33
      %s22 = sphi 0, %s29
      %s23 = sphi 0, %s21
      %s24 = sphi 0, %s22
      %s25 = sphi 0, %s23
      %s26 = sphi 0, %s24
      %s36 = sphi 0, %s38
      %s39 = sphi 0, %s36
      %s40 = sphi 0, %s39
      %s56 = sphi 0, %s40
      %s62 = sphi 0, %s64
      %s65 = sphi 0, %s62
      %s66 = sphi 0, %s65
      %s82 = sphi 0, %s66
      %s88 = sphi 0, %s90
      %s91 = sphi 0, %s88
      %s92 = sphi 0, %s91
      %s108 = sphi 0, %s92
      %s114 = sphi 0, %s116
      %s117 = sphi 0, %s114
      %s118 = sphi 0, %s117
      %s134 = sphi 0, %s118
      %s140 = sphi 0, %s142
      %s143 = sphi 0, %s140
      %s144 = sphi 0, %s143
      %s160 = sphi 0, %s144
      %s168 = sphi 0, %s170
      %s171 = sphi 0, %s168
      %s172 = sphi 0, %s171
      %s188 = sphi 0, %s172
    $region4: #{tpu_custom_call.1} parent=1 // loop_header_branch
      %17 = sbr.rel (%p15) target = $region8
    $region5: #{tpu_custom_call.1} parent=1 // loop_body
      %s19 = ssub.s32 %s14, 1
      %s20 = ssub.s32 %s14, 2
      %s27 = sadd.s32 1, %s22
      %p28 = scmp.ge.s32.totalorder %s27, 3
      %s29 = scalar_select %p28, 0, %s27
      %s30 = sadd.s32 1, %s21
      %s31 = scalar_select %p28, %s30, %s21
      %p32 = scmp.ge.s32.totalorder %s31, 2
      %s33 = scalar_select %p32, 0, %s31
      %s34 = ssub.s32 %s21, %s33
      %p35 = scmp.eq.s32.totalorder %s34, 0
      %s37 = sadd.s32 %s36, 1
      %s38 = scalar_select %p35, %s36, %s37
      %p41 = pneg %p35
      %p42 = scmp.eq.s32.totalorder %s14, 5
      %p43 = por %p41, %p42
      %p44 = scmp.ne.s32.totalorder %s36, %s39
      %p45 = scmp.eq.s32.totalorder %s14, 0
      %p46 = por %p44, %p45
      %p47 = scmp.ne.s32.totalorder %s36, %s39
      %p48 = scmp.eq.s32.totalorder %s19, 5
      %p49 = por %p47, %p48
      %p50 = scmp.ne.s32.totalorder %s39, %s40
      %p51 = scmp.eq.s32.totalorder %s19, 0
      %p52 = por %p50, %p51
      %p53 = scmp.ne.s32.totalorder %s39, %s40
      %p54 = scmp.eq.s32.totalorder %s20, 5
      %p55 = por %p53, %p54
      %p57 = scmp.ne.s32.totalorder %s40, %s56
      %p58 = scmp.eq.s32.totalorder %s20, 0
      %p59 = por %p57, %p58
      %s60 = ssub.s32 %s22, %s29
      %p61 = scmp.eq.s32.totalorder %s60, 0
      %s63 = sadd.s32 %s62, 1
      %s64 = scalar_select %p61, %s62, %s63
      %p67 = pneg %p61
      %p68 = scmp.eq.s32.totalorder %s14, 5
      %p69 = por %p67, %p68
      %p70 = scmp.ne.s32.totalorder %s62, %s65
      %p71 = scmp.eq.s32.totalorder %s14, 0
      %p72 = por %p70, %p71
      %p73 = scmp.ne.s32.totalorder %s62, %s65
      %p74 = scmp.eq.s32.totalorder %s19, 5
      %p75 = por %p73, %p74
      %p76 = scmp.ne.s32.totalorder %s65, %s66
      %p77 = scmp.eq.s32.totalorder %s19, 0
      %p78 = por %p76, %p77
      %p79 = scmp.ne.s32.totalorder %s65, %s66
      %p80 = scmp.eq.s32.totalorder %s20, 5
      %p81 = por %p79, %p80
      %p83 = scmp.ne.s32.totalorder %s66, %s82
      %p84 = scmp.eq.s32.totalorder %s20, 0
      %p85 = por %p83, %p84
      %s86 = ssub.s32 %s21, %s33
      %p87 = scmp.eq.s32.totalorder %s86, 0
      %s89 = sadd.s32 %s88, 1
      %s90 = scalar_select %p87, %s88, %s89
      %p93 = pneg %p87
      %p94 = scmp.eq.s32.totalorder %s14, 5
      %p95 = por %p93, %p94
      %p96 = scmp.ne.s32.totalorder %s88, %s91
      %p97 = scmp.eq.s32.totalorder %s14, 0
      %p98 = por %p96, %p97
      %p99 = scmp.ne.s32.totalorder %s88, %s91
      %p100 = scmp.eq.s32.totalorder %s19, 5
      %p101 = por %p99, %p100
      %p102 = scmp.ne.s32.totalorder %s91, %s92
      %p103 = scmp.eq.s32.totalorder %s19, 0
      %p104 = por %p102, %p103
      %p105 = scmp.ne.s32.totalorder %s91, %s92
      %p106 = scmp.eq.s32.totalorder %s20, 5
      %p107 = por %p105, %p106
      %p109 = scmp.ne.s32.totalorder %s92, %s108
      %p110 = scmp.eq.s32.totalorder %s20, 0
      %p111 = por %p109, %p110
      %s112 = ssub.s32 %s22, %s29
      %p113 = scmp.eq.s32.totalorder %s112, 0
      %s115 = sadd.s32 %s114, 1
      %s116 = scalar_select %p113, %s114, %s115
      %p119 = pneg %p113
      %p120 = scmp.eq.s32.totalorder %s14, 5
      %p121 = por %p119, %p120
      %p122 = scmp.ne.s32.totalorder %s114, %s117
      %p123 = scmp.eq.s32.totalorder %s14, 0
      %p124 = por %p122, %p123
      %p125 = scmp.ne.s32.totalorder %s114, %s117
      %p126 = scmp.eq.s32.totalorder %s19, 5
      %p127 = por %p125, %p126
      %p128 = scmp.ne.s32.totalorder %s117, %s118
      %p129 = scmp.eq.s32.totalorder %s19, 0
      %p130 = por %p128, %p129
      %p131 = scmp.ne.s32.totalorder %s117, %s118
      %p132 = scmp.eq.s32.totalorder %s20, 5
      %p133 = por %p131, %p132
      %p135 = scmp.ne.s32.totalorder %s118, %s134
      %p136 = scmp.eq.s32.totalorder %s20, 0
      %p137 = por %p135, %p136
      %s138 = ssub.s32 %s21, %s33
      %p139 = scmp.eq.s32.totalorder %s138, 0
      %s141 = sadd.s32 %s140, 1
      %s142 = scalar_select %p139, %s140, %s141
      %p145 = pneg %p139
      %p146 = scmp.eq.s32.totalorder %s14, 5
      %p147 = por %p145, %p146
      %p148 = scmp.ne.s32.totalorder %s140, %s143
      %p149 = scmp.eq.s32.totalorder %s14, 0
      %p150 = por %p148, %p149
      %p151 = scmp.ne.s32.totalorder %s140, %s143
      %p152 = scmp.eq.s32.totalorder %s19, 5
      %p153 = por %p151, %p152
      %p154 = scmp.ne.s32.totalorder %s143, %s144
      %p155 = scmp.eq.s32.totalorder %s19, 0
      %p156 = por %p154, %p155
      %p157 = scmp.ne.s32.totalorder %s143, %s144
      %p158 = scmp.eq.s32.totalorder %s20, 5
      %p159 = por %p157, %p158
      %p161 = scmp.ne.s32.totalorder %s144, %s160
      %p162 = scmp.eq.s32.totalorder %s20, 0
      %p163 = por %p161, %p162
      %s164 = ssub.s32 %s21, %s33
      %s165 = ssub.s32 %s22, %s29
      %s166 = sor.u32 %s164, %s165
      %p167 = scmp.eq.s32.totalorder %s166, 0
      %s169 = sadd.s32 %s168, 1
      %s170 = scalar_select %p167, %s168, %s169
      %p173 = pneg %p167
      %p174 = scmp.eq.s32.totalorder %s14, 5
      %p175 = por %p173, %p174
      %p176 = scmp.ne.s32.totalorder %s168, %s171
      %p177 = scmp.eq.s32.totalorder %s14, 0
      %p178 = por %p176, %p177
      %p179 = scmp.ne.s32.totalorder %s168, %s171
      %p180 = scmp.eq.s32.totalorder %s19, 5
      %p181 = por %p179, %p180
      %p182 = scmp.ne.s32.totalorder %s171, %s172
      %p183 = scmp.eq.s32.totalorder %s19, 0
      %p184 = por %p182, %p183
      %p185 = scmp.ne.s32.totalorder %s171, %s172
      %p186 = scmp.eq.s32.totalorder %s20, 5
      %p187 = por %p185, %p186
      %p189 = scmp.ne.s32.totalorder %s172, %s188
      %p190 = scmp.eq.s32.totalorder %s20, 0
      %p191 = por %p189, %p190
      %p192 = scmp.le.s32.totalorder 1, %s14
      %p193 = scmp.lt.s32.totalorder %s14, 7
      %p194 = pnand %p192, %p193
      %p195 = pneg %p194
      // Predicated region
      $region9: #{tpu_custom_call.1} parent=5 // pred_check
        _
      $region10: #{tpu_custom_call.1} parent=5 // pred_check_branch
        %197 = sbr.rel (%p194) target = $region12
      $region11: #{tpu_custom_call.1} parent=5 // pred_region
        %s198 = ssub.s32 %s14, 1
      $region12: #{tpu_custom_call.1} parent=5 // pred_fallthru
        _
      %p199 = scmp.lt.s32.totalorder %s14, 6
      // Predicated region
      $region13: #{tpu_custom_call.1} parent=5 // pred_check
        %p200 = pneg %p199
      $region14: #{tpu_custom_call.1} parent=5 // pred_check_branch
        %202 = sbr.rel (%p200) target = $region16
      $region15: #{tpu_custom_call.1} parent=5 // pred_region
        // Predicated region
        $region17: #{tpu_custom_call.1} parent=15 // pred_check
          %p203 = pneg %p46
        $region18: #{tpu_custom_call.1} parent=15 // pred_check_branch
          %205 = sbr.rel (%p203) target = $region20
        $region19: #{tpu_custom_call.1} parent=15 // pred_region
          %p206 = scmp.lt.s32.totalorder %s21, 1
          %s207 = scalar_select %p206, %s21, 1
          %s208 = smul.addr %s207, 2
          %s209 = smul.addr %s208, 8
          %s210 = scalar_lea.vmem %s0, %s209
        $region20: #{tpu_custom_call.1} parent=15 // pred_fallthru
          _
        // Predicated region
        $region21: #{tpu_custom_call.1} parent=15 // pred_check
          %p211 = pneg %p72
        $region22: #{tpu_custom_call.1} parent=15 // pred_check_branch
          %213 = sbr.rel (%p211) target = $region24
        $region23: #{tpu_custom_call.1} parent=15 // pred_region
          %s214 = smul.u32 16, %s22
          %p215 = scmp.lt.s32.totalorder %s214, 47
          %s216 = scalar_select %p215, %s214, 47
          %s217 = smul.addr %s216, 2
          %s218 = smul.addr %s217, 8
          %s219 = scalar_lea.vmem %s1, %s218
          %s220 = smul.u32 16, %s22
        $region24: #{tpu_custom_call.1} parent=15 // pred_fallthru
          _
        // Predicated region
        $region25: #{tpu_custom_call.1} parent=15 // pred_check
          %p221 = pneg %p98
        $region26: #{tpu_custom_call.1} parent=15 // pred_check_branch
          %223 = sbr.rel (%p221) target = $region28
        $region27: #{tpu_custom_call.1} parent=15 // pred_region
          %p224 = scmp.lt.s32.totalorder %s21, 1
          %s225 = scalar_select %p224, %s21, 1
          %s226 = smul.addr %s225, 8
          %s227 = scalar_lea.vmem %s2, %s226
        $region28: #{tpu_custom_call.1} parent=15 // pred_fallthru
          _
        // Predicated region
        $region29: #{tpu_custom_call.1} parent=15 // pred_check
          %p228 = pneg %p124
        $region30: #{tpu_custom_call.1} parent=15 // pred_check_branch
          %230 = sbr.rel (%p228) target = $region32
        $region31: #{tpu_custom_call.1} parent=15 // pred_region
          %p231 = scmp.lt.s32.totalorder %s22, 2
          %s232 = scalar_select %p231, %s22, 2
          %s233 = scalar_lea.vmem %s3, %s232
        $region32: #{tpu_custom_call.1} parent=15 // pred_fallthru
          _
        // Predicated region
        $region33: #{tpu_custom_call.1} parent=15 // pred_check
          %p234 = pneg %p150
        $region34: #{tpu_custom_call.1} parent=15 // pred_check_branch
          %236 = sbr.rel (%p234) target = $region36
        $region35: #{tpu_custom_call.1} parent=15 // pred_region
          %p237 = scmp.lt.s32.totalorder %s21, 1
          %s238 = scalar_select %p237, %s21, 1
          %s239 = smul.addr %s238, 8
          %s240 = scalar_lea.vmem %s4, %s239
        $region36: #{tpu_custom_call.1} parent=15 // pred_fallthru
          _
      $region16: #{tpu_custom_call.1} parent=5 // pred_fallthru
        _
      %p241 = scmp.le.s32.totalorder 1, %s14
      %p242 = scmp.lt.s32.totalorder %s14, 7
      %p243 = pnand %p241, %p242
      %p244 = pneg %p243
      // Predicated region
      $region37: #{tpu_custom_call.1} parent=5 // pred_check
        _
      $region38: #{tpu_custom_call.1} parent=5 // pred_check_branch
        %246 = sbr.rel (%p243) target = $region40
      $region39: #{tpu_custom_call.1} parent=5 // pred_region
        %s247 = ssub.s32 %s14, 1
        %p248 = scmp.lt.s32.totalorder %s23, 1
        %s249 = scalar_select %p248, %s23, 1
        %s250 = smul.addr %s249, 2
        %s251 = smul.addr %s250, 8
        %s252 = scalar_lea.vmem %s0, %s251
        %p253 = pneg %p52
        %p254 = pneg %p49
        %s255 = smul.u32 16, %s24
        %p256 = scmp.lt.s32.totalorder %s255, 47
        %s257 = scalar_select %p256, %s255, 47
        %s258 = smul.addr %s257, 2
        %s259 = smul.addr %s258, 8
        %s260 = scalar_lea.vmem %s1, %s259
        %p261 = pneg %p78
        %p262 = pneg %p75
        %p263 = scmp.lt.s32.totalorder %s23, 1
        %s264 = scalar_select %p263, %s23, 1
        %s265 = smul.addr %s264, 8
        %s266 = scalar_lea.vmem %s2, %s265
        %p267 = pneg %p104
        %p268 = pneg %p101
        %p269 = scmp.lt.s32.totalorder %s24, 2
        %s270 = scalar_select %p269, %s24, 2
        %s271 = scalar_lea.vmem %s3, %s270
        %p272 = pneg %p130
        %p273 = pneg %p127
        %p274 = scmp.lt.s32.totalorder %s23, 1
        %s275 = scalar_select %p274, %s23, 1
        %s276 = smul.addr %s275, 8
        %s277 = scalar_lea.vmem %s4, %s276
        %p278 = pneg %p156
        %p279 = pneg %p153
        %p280 = pneg %p184
        %p281 = pneg %p181
        %s282 = sand.u32 %s171, 1
        %s283 = scalar_lea.sflag [#allocation3], %s282
        %s284 = sand.u32 %s171, 1
        %s285 = smul.addr %s284, 8
        %s286 = scalar_lea.vmem [#allocation2], %s285
        %p287 = scmp.lt.s32.totalorder %s23, 1
        %s288 = scalar_select %p287, %s23, 1
        %s289 = smul.addr %s288, 2
        %s290 = smul.addr %s289, 8
        %s291 = scalar_lea.vmem %s0, %s290
        %s292 = smul.u32 16, %s24
        %p293 = scmp.lt.s32.totalorder %s292, 47
        %s294 = scalar_select %p293, %s292, 47
        %s295 = smul.addr %s294, 2
        %s296 = smul.addr %s295, 8
        %s297 = scalar_lea.vmem %s1, %s296
        %s298 = smul.u32 16, %s24
        %p299 = scmp.lt.s32.totalorder %s23, 1
        %s300 = scalar_select %p299, %s23, 1
        %s301 = smul.addr %s300, 8
        %s302 = scalar_lea.vmem %s2, %s301
        %p303 = scmp.lt.s32.totalorder %s24, 2
        %s304 = scalar_select %p303, %s24, 2
        %s305 = scalar_lea.vmem %s3, %s304
        %p306 = scmp.lt.s32.totalorder %s23, 1
        %s307 = scalar_select %p306, %s23, 1
        %s308 = smul.addr %s307, 8
        %s309 = scalar_lea.vmem %s4, %s308
        %v310 = vld [vmem:[%s291] sm:$0xff]
        %v311 = vld [vmem:[%s291 + $0x8] sm:$0xff]
        %v312 = vld [vmem:[%s297] sm:$0xff]
        %v313 = vld [vmem:[%s297 + $0x8] sm:$0xff]
        %v314 = vld [vmem:[%s297 + $0x10] sm:$0xff]
        %v315 = vld [vmem:[%s297 + $0x18] sm:$0xff]
        %v316 = vld [vmem:[%s297 + $0x20] sm:$0xff]
        %v317 = vld [vmem:[%s297 + $0x28] sm:$0xff]
        %v318 = vld [vmem:[%s297 + $0x30] sm:$0xff]
        %v319 = vld [vmem:[%s297 + $0x38] sm:$0xff]
        %v320 = vld [vmem:[%s297 + $0x40] sm:$0xff]
        %v321 = vld [vmem:[%s297 + $0x48] sm:$0xff]
        %v322 = vld [vmem:[%s297 + $0x50] sm:$0xff]
        %v323 = vld [vmem:[%s297 + $0x58] sm:$0xff]
        %v324 = vld [vmem:[%s297 + $0x60] sm:$0xff]
        %v325 = vld [vmem:[%s297 + $0x68] sm:$0xff]
        %v326 = vld [vmem:[%s297 + $0x70] sm:$0xff]
        %v327 = vld [vmem:[%s297 + $0x78] sm:$0xff]
        %v328 = vld [vmem:[%s297 + $0x80] sm:$0xff]
        %v329 = vld [vmem:[%s297 + $0x88] sm:$0xff]
        %v330 = vld [vmem:[%s297 + $0x90] sm:$0xff]
        %v331 = vld [vmem:[%s297 + $0x98] sm:$0xff]
        %v332 = vld [vmem:[%s297 + $0xa0] sm:$0xff]
        %v333 = vld [vmem:[%s297 + $0xa8] sm:$0xff]
        %v334 = vld [vmem:[%s297 + $0xb0] sm:$0xff]
        %v335 = vld [vmem:[%s297 + $0xb8] sm:$0xff]
        %v336 = vld [vmem:[%s297 + $0xc0] sm:$0xff]
        %v337 = vld [vmem:[%s297 + $0xc8] sm:$0xff]
        %v338 = vld [vmem:[%s297 + $0xd0] sm:$0xff]
        %v339 = vld [vmem:[%s297 + $0xd8] sm:$0xff]
        %v340 = vld [vmem:[%s297 + $0xe0] sm:$0xff]
        %v341 = vld [vmem:[%s297 + $0xe8] sm:$0xff]
        %v342 = vld [vmem:[%s297 + $0xf0] sm:$0xff]
        %v343 = vld [vmem:[%s297 + $0xf8] sm:$0xff]
        %vm344 = vcmask 523264
        %v346 = vsel %vm344, %v311, 0
        %v349 = vsel %vm344, %v313, 0
        %v352 = vsel %vm344, %v315, 0
        %v355 = vsel %vm344, %v317, 0
        %v358 = vsel %vm344, %v319, 0
        %v361 = vsel %vm344, %v321, 0
        %v364 = vsel %vm344, %v323, 0
        %v367 = vsel %vm344, %v325, 0
        %v370 = vsel %vm344, %v327, 0
        %v373 = vsel %vm344, %v329, 0
        %v376 = vsel %vm344, %v331, 0
        %v379 = vsel %vm344, %v333, 0
        %v382 = vsel %vm344, %v335, 0
        %v385 = vsel %vm344, %v337, 0
        %v388 = vsel %vm344, %v339, 0
        %v391 = vsel %vm344, %v341, 0
        %v394 = vsel %vm344, %v343, 0
        %396 = vmatpush.xpose.msra.mxu0 %v342
        %397 = vmatpush.xpose.msra.mxu0 %v340
        %398 = vmatpush.xpose.msra.mxu0 %v338
        %399 = vmatpush.xpose.msra.mxu0 %v336
        %400 = vmatpush.xpose.msra.mxu0 %v334
        %401 = vmatpush.xpose.msra.mxu0 %v332
        %402 = vmatpush.xpose.msra.mxu0 %v330
        %403 = vmatpush.xpose.msra.mxu0 %v328
        %404 = vmatpush.xpose.msra.mxu0 %v326
        %405 = vmatpush.xpose.msra.mxu0 %v324
        %406 = vmatpush.xpose.msra.mxu0 %v322
        %407 = vmatpush.xpose.msra.mxu0 %v320
        %408 = vmatpush.xpose.msra.mxu0 %v318
        %409 = vmatpush.xpose.msra.mxu0 %v316
        %410 = vmatpush.xpose.msra.mxu0 %v314
        %411 = vmatpush.xpose.msra.mxu0 %v312
        %412 = vmatmul.f32.gmra.mxu0 %v310
        %v413 = vpop.f32.mrf.mxu0
        %v414 = vadd.f32 0.0, %v413
        %415 = vdwg.mxu0
        %416 = vmatpush.xpose.msra.mxu0 %v394
        %417 = vmatpush.xpose.msra.mxu0 %v391
        %418 = vmatpush.xpose.msra.mxu0 %v388
        %419 = vmatpush.xpose.msra.mxu0 %v385
        %420 = vmatpush.xpose.msra.mxu0 %v382
        %421 = vmatpush.xpose.msra.mxu0 %v379
        %422 = vmatpush.xpose.msra.mxu0 %v376
        %423 = vmatpush.xpose.msra.mxu0 %v373
        %424 = vmatpush.xpose.msra.mxu0 %v370
        %425 = vmatpush.xpose.msra.mxu0 %v367
        %426 = vmatpush.xpose.msra.mxu0 %v364
        %427 = vmatpush.xpose.msra.mxu0 %v361
        %428 = vmatpush.xpose.msra.mxu0 %v358
        %429 = vmatpush.xpose.msra.mxu0 %v355
        %430 = vmatpush.xpose.msra.mxu0 %v352
        %431 = vmatpush.xpose.msra.mxu0 %v349
        %432 = vmatmul.f32.gmra.mxu0 %v346
        %v433 = vpop.f32.mrf.mxu0
        %v434 = vadd.f32 %v414, %v433
        %435 = vdwg.mxu0
        %v436 = vld [vmem:[%s302] sm:$0xff]
        %438 = vset.pattern.permute.xlu0 0
        %439 = vperm.xlu0 %438, %v436
        %v440 = vpop.permute.xlu0 %439
        %v442 = vmul.f32 %v434, %v440
        %v443 = vld [vmem:[%s305] sm:$0x1]
        %v445 = vperm.slane %v443, 0
        %v447 = vmul.f32 %v442, %v445
        %v448 = vlaneseq
        %v449 = vand.u32 %v448, 127
        %s450 = smul.u32 %s24, 128
        %v451 = vstv %s450
        %v452 = vadd.s32 %v449, %v451
        %v453 = vld [vmem:[%s309] sm:$0xff]
        %454 = vset.pattern.permute.xlu0 0
        %455 = vperm.xlu0 %454, %v453
        %v456 = vpop.permute.xlu0 %455
        %vm457 = vcmp.eq.s32.totalorder %v452, %v456
        %v458 = vsub.f32 %v447, 0.2
        %v459 = vsel %vm457, %v458, %v447
        %v460 = vmul.f32 %v459, 30.0
        %461 = vst [vmem:[%s286] sm:$0xff] %v460
        %s462 = sand.u32 %s171, 1
        %s463 = scalar_lea.sflag [#allocation3], %s462
        %s464 = sand.u32 %s171, 1
        %s465 = smul.addr %s464, 8
        %s466 = scalar_lea.vmem [#allocation2], %s465
        // Predicated region
        $region41: #{tpu_custom_call.1} parent=39 // pred_check
          %p467 = pneg %p181
        $region42: #{tpu_custom_call.1} parent=39 // pred_check_branch
          %469 = sbr.rel (%p467) target = $region44
        $region43: #{tpu_custom_call.1} parent=39 // pred_region
          %471 = vsyncadd %s463, 0
          %s472 = smul.addr %s23, 3
          %s473 = sadd.s32 %s24, %s472
          %s474 = smul.addr %s473, 8
          %s475 = scalar_lea.hbm %s5, %s474
          %s477 = sshll.u32 %s466, 4
          %s478 = int_to_ptr.vmem [resolvable:$true] %s477
          %s479 = sshll.u32 %s475, 4
          %s480 = int_to_ptr.hbm [resolvable:$true] %s479
          %482 = dma.vmem_to_hbm [thread:$0]  %s478, 128, %s480, %s463
        $region44: #{tpu_custom_call.1} parent=39 // pred_fallthru
          _
      $region40: #{tpu_custom_call.1} parent=5 // pred_fallthru
        _
      %p483 = scmp.le.s32.totalorder 2, %s14
      // Predicated region
      $region45: #{tpu_custom_call.1} parent=5 // pred_check
        %p484 = pneg %p483
      $region46: #{tpu_custom_call.1} parent=5 // pred_check_branch
        %486 = sbr.rel (%p484) target = $region48
      $region47: #{tpu_custom_call.1} parent=5 // pred_region
        %s487 = ssub.s32 %s14, 2
        // Predicated region
        $region49: #{tpu_custom_call.1} parent=47 // pred_check
          %p488 = pneg %p187
        $region50: #{tpu_custom_call.1} parent=47 // pred_check_branch
          %490 = sbr.rel (%p488) target = $region52
        $region51: #{tpu_custom_call.1} parent=47 // pred_region
          %s491 = sand.u32 %s172, 1
          %s492 = scalar_lea.sflag [#allocation3], %s491
          %s493 = sand.u32 %s172, 1
          %s494 = smul.addr %s493, 8
          %s495 = scalar_lea.vmem [#allocation2], %s494
          %497 = dma.done %s492, 128
        $region52: #{tpu_custom_call.1} parent=47 // pred_fallthru
          _
      $region48: #{tpu_custom_call.1} parent=5 // pred_fallthru
        _
    $region6: #{tpu_custom_call.1} parent=1 // loop_footer
      %s18 = sadd.s32 1, %s14
    $region7: #{tpu_custom_call.1} parent=1 // loop_footer_branch
      %13 = sbr.rel target = $region3
    $region8: #{tpu_custom_call.1} parent=1 // loop_exit
      _
    %498 = vsyncpa [#allocation3], 1
    %s499 = scalar_lea.sflag [#allocation3], 1
    %500 = vsyncpa %s499, 1

</llo_original>
